<compile_context>
chip_gen: v7x
topology: tpu7x:2x2x1
jax: 0.10.0
libtpu: 0.0.40
codegen_flags: <defaults>
</compile_context>

<pallas_src>
import functools

import jax
import jax.numpy as jnp
from jax import lax
from jax.experimental import pallas as pl
from jax.experimental.pallas import tpu as pltpu


def _cbow_kernel(ctx_ref, emb_ref, w_ref, b_ref, out_ref, *, inv_c):
    ctx = ctx_ref[...]                      # (Bp, C)  int32
    emb = emb_ref[...]                      # (V, E)   f32   (full embedding table)
    w = w_ref[...]                          # (TV, E)  f32   (torch Linear layout)
    b = b_ref[...]                          # (1, TV)  f32

    Bp, C = ctx.shape
    V = emb.shape[0]

    # One-hot counts over the vocabulary: counts[b, v] = #{c : ctx[b, c] == v}.
    # int32 compare + f32 sum on the VPU (exact; v5e has no bf16 VPU so keep
    # elementwise work in f32).  Out-of-range indices simply never match and
    # contribute zero (the ValueError semantics are enforced host-side).
    vocab_iota = lax.broadcasted_iota(jnp.int32, (Bp, C, V), 2)
    onehot = (ctx[:, :, None] == vocab_iota).astype(jnp.float32)   # (Bp, C, V)
    counts = jnp.sum(onehot, axis=1)                               # (Bp, V)

    # Mean context embedding: bf16 operands on the MXU (counts are small exact
    # integers in bf16), f32 accumulation, then one f32 scale by 1/C.
    mean_emb = jnp.dot(
        counts.astype(jnp.bfloat16), emb.astype(jnp.bfloat16),
        preferred_element_type=jnp.float32) * inv_c                # (Bp, E) f32

    # Decoder linear: contract on E directly against the (TV, E) torch-layout
    # weight (MXU handles the transposed-B contraction natively), f32 acc,
    # f32 bias add.
    logits = lax.dot_general(
        mean_emb.astype(jnp.bfloat16), w.astype(jnp.bfloat16),
        dimension_numbers=(((1,), (1,)), ((), ())),
        preferred_element_type=jnp.float32)                        # (Bp, TV)
    out_ref[...] = logits + b


@jax.jit
def center_word_predictor(ctx, emb_table, dec_weight, dec_bias):
    """ctx: (B, C) int32; emb_table: (V, E) f32; dec_weight: (V, E) f32 (torch
    layout, NOT pre-transposed); dec_bias: (V,) f32. Returns (B, V) f32 logits."""
    B, C = ctx.shape
    V, E = emb_table.shape

    # Pad batch to a sublane multiple so (Bp, TV) output stores are unmasked.
    Bp = ((B + 7) // 8) * 8
    ctx_p = ctx if Bp == B else jnp.zeros((Bp, C), jnp.int32).at[:B].set(ctx)

    # Tile the output-vocab dim; a single tile at toy V, but the axis is marked
    # "parallel" so larger V shards across v7x's two TensorCores.
    TV = V if V <= 512 else 512
    assert V % TV == 0, "toy wrapper assumes V is a multiple of the V-tile"
    grid = (V // TV,)

    bias2d = dec_bias.reshape(1, V)

    out_p = pl.pallas_call(
        functools.partial(_cbow_kernel, inv_c=float(1.0 / C)),
        out_shape=jax.ShapeDtypeStruct((Bp, V), jnp.float32),
        grid_spec=pl.GridSpec(
            grid=grid,
            in_specs=[
                pl.BlockSpec((Bp, C), lambda j: (0, 0)),    # context indices
                pl.BlockSpec((V, E), lambda j: (0, 0)),     # full embedding table
                pl.BlockSpec((TV, E), lambda j: (j, 0)),    # decoder weight V-tile
                pl.BlockSpec((1, TV), lambda j: (0, j)),    # bias V-tile
            ],
            out_specs=pl.BlockSpec((Bp, TV), lambda j: (0, j)),
        ),
        compiler_params=pltpu.CompilerParams(
            dimension_semantics=("parallel",),
        ),
    )(ctx_p, emb_table, dec_weight, bias2d)

    return out_p[:B]


def _reference(ctx, emb_table, dec_weight, dec_bias):
    emb = emb_table[ctx]                    # (B, C, E)
    mean_emb = emb.mean(axis=1)             # (B, E)
    return mean_emb @ dec_weight.T + dec_bias


if __name__ == "__main__":
    vocabulary_size = 128
    embedding_dimension = 32
    batch = 2
    context_len = 8

    key = jax.random.PRNGKey(0)
    k_ctx, k_emb, k_w, k_b = jax.random.split(key, 4)

    # Deterministic synthetic parameters (shapes per nn.Embedding / nn.Linear).
    ctx = jax.random.randint(k_ctx, (batch, context_len), 0, vocabulary_size, dtype=jnp.int32)
    emb_table = jax.random.normal(k_emb, (vocabulary_size, embedding_dimension), dtype=jnp.float32)
    bound = 1.0 / (embedding_dimension ** 0.5)
    dec_weight = jax.random.uniform(
        k_w, (vocabulary_size, embedding_dimension), minval=-bound, maxval=bound, dtype=jnp.float32)
    dec_bias = jax.random.uniform(
        k_b, (vocabulary_size,), minval=-bound, maxval=bound, dtype=jnp.float32)

    # Host-side bounds check mirroring the PyTorch ValueError (data-dependent
    # raises cannot live inside the kernel).
    if bool(jnp.any(ctx >= vocabulary_size)):
        raise ValueError("Index out of bounds in context tensor")

    out = center_word_predictor(ctx, emb_table, dec_weight, dec_bias)
    out = jax.block_until_ready(out)

    ref = _reference(ctx, emb_table, dec_weight, dec_bias)
    assert out.shape == (batch, vocabulary_size)
    # bf16 MXU operands (f32 accumulation) => ~1e-2-level deviation vs the pure
    # f32 reference, so the tolerance is loosened accordingly.
    assert jnp.allclose(out, ref, atol=5e-2, rtol=5e-2), float(jnp.max(jnp.abs(out - ref)))

    print("KERNEL_OK")
</pallas_src>

<mosaic_0001>
module attributes {stable_mosaic.version = 11 : i64} {
  func.func @_cbow_kernel(%arg0: i32, %arg1: memref<8x8xi32, #tpu.memory_space<vmem>>, %arg2: memref<128x32xf32, #tpu.memory_space<vmem>>, %arg3: memref<128x32xf32, #tpu.memory_space<vmem>>, %arg4: memref<1x128xf32, #tpu.memory_space<vmem>>, %arg5: memref<8x128xf32, #tpu.memory_space<vmem>>) attributes {dimension_semantics = [#tpu.dimension_semantics<parallel>], iteration_bounds = array<i64: 1>, scalar_prefetch = 0 : i64, scratch_operands = 0 : i64, tpu.core_type = #tpu.core_type<tc>, window_params = [{pipeline_mode = #tpu.pipeline_mode<synchronous>, transform_indices = @transform_0, window_bounds = array<i64: 8, 8>}, {pipeline_mode = #tpu.pipeline_mode<synchronous>, transform_indices = @transform_1, window_bounds = array<i64: 128, 32>}, {transform_indices = @transform_2, window_bounds = array<i64: 128, 32>}, {transform_indices = @transform_3, window_bounds = array<i64: 1, 128>}, {transform_indices = @transform_4, window_bounds = array<i64: 8, 128>}]} {
    %c0 = arith.constant 0 : index
    %c0_0 = arith.constant 0 : index
    %0 = vector.load %arg1[%c0, %c0_0] : memref<8x8xi32, #tpu.memory_space<vmem>>, vector<8x8xi32>
    %c0_1 = arith.constant 0 : index
    %c0_2 = arith.constant 0 : index
    %1 = vector.load %arg2[%c0_1, %c0_2] : memref<128x32xf32, #tpu.memory_space<vmem>>, vector<128x32xf32>
    %c0_3 = arith.constant 0 : index
    %c0_4 = arith.constant 0 : index
    %2 = vector.load %arg3[%c0_3, %c0_4] : memref<128x32xf32, #tpu.memory_space<vmem>>, vector<128x32xf32>
    %c0_5 = arith.constant 0 : index
    %c0_6 = arith.constant 0 : index
    %3 = vector.load %arg4[%c0_5, %c0_6] : memref<1x128xf32, #tpu.memory_space<vmem>>, vector<1x128xf32>
    %4 = tpu.iota {dimensions = array<i32: 2>} : vector<8x8x128xi32>
    %5 = vector.shape_cast %0 : vector<8x8xi32> to vector<8x8x1xi32>
    %6 = vector.broadcast %5 : vector<8x8x1xi32> to vector<8x8x128xi32>
    %7 = arith.cmpi eq, %6, %4 : vector<8x8x128xi32>
    %8 = arith.extui %7 : vector<8x8x128xi1> to vector<8x8x128xi32>
    %9 = arith.sitofp %8 : vector<8x8x128xi32> to vector<8x8x128xf32>
    %cst = arith.constant dense<0.000000e+00> : vector<8x128xf32>
    %10 = vector.multi_reduction <add>, %9, %cst [1] : vector<8x8x128xf32> to vector<8x128xf32>
    %11 = arith.truncf %10 : vector<8x128xf32> to vector<8x128xbf16>
    %12 = arith.truncf %1 : vector<128x32xf32> to vector<128x32xbf16>
    %cst_7 = arith.constant dense<0.000000e+00> : vector<8x32xf32>
    %13 = tpu.matmul %11, %12, %cst_7 {dimension_numbers = #tpu.dot_dimension_numbers<[1], [0], [0], [1], [0, 0, 1, 1], [], []>} : vector<8x128xbf16>, vector<128x32xbf16>, vector<8x32xf32> -> vector<8x32xf32>
    %cst_8 = arith.constant 1.250000e-01 : f32
    %14 = vector.broadcast %cst_8 : f32 to vector<8x32xf32>
    %15 = arith.mulf %13, %14 : vector<8x32xf32>
    %16 = arith.truncf %15 : vector<8x32xf32> to vector<8x32xbf16>
    %17 = arith.truncf %2 : vector<128x32xf32> to vector<128x32xbf16>
    %cst_9 = arith.constant dense<0.000000e+00> : vector<8x128xf32>
    %18 = tpu.matmul %16, %17, %cst_9 {dimension_numbers = #tpu.dot_dimension_numbers<[1], [1], [0], [0], [0, 0, 1, 0], [], []>} : vector<8x32xbf16>, vector<128x32xbf16>, vector<8x128xf32> -> vector<8x128xf32>
    %19 = vector.broadcast %3 : vector<1x128xf32> to vector<8x128xf32>
    %20 = arith.addf %18, %19 : vector<8x128xf32>
    %c0_10 = arith.constant 0 : index
    %c0_11 = arith.constant 0 : index
    %21 = vector.load %arg5[%c0_10, %c0_11] : memref<8x128xf32, #tpu.memory_space<vmem>>, vector<8x128xf32>
    tpu.vector_store %arg5[%c0_10, %c0_11], %20 {strides = array<i32>} : memref<8x128xf32, #tpu.memory_space<vmem>>, vector<8x128xf32>,
    return
  }
  func.func @transform_0(%arg0: i32) -> (i32, i32) {
    %c0_i32 = arith.constant 0 : i32
    %c0_i32_0 = arith.constant 0 : i32
    %c0_i32_1 = arith.constant 0 : i32
    return %c0_i32, %c0_i32_0 : i32, i32
  }
  func.func @transform_1(%arg0: i32) -> (i32, i32) {
    %c0_i32 = arith.constant 0 : i32
    %c0_i32_0 = arith.constant 0 : i32
    %c0_i32_1 = arith.constant 0 : i32
    return %c0_i32, %c0_i32_0 : i32, i32
  }
  func.func @transform_2(%arg0: i32) -> (i32, i32) {
    %c0_i32 = arith.constant 0 : i32
    %c0_i32_0 = arith.constant 0 : i32
    return %arg0, %c0_i32 : i32, i32
  }
  func.func @transform_3(%arg0: i32) -> (i32, i32) {
    %c0_i32 = arith.constant 0 : i32
    %c0_i32_0 = arith.constant 0 : i32
    return %c0_i32, %arg0 : i32, i32
  }
  func.func @transform_4(%arg0: i32) -> (i32, i32) {
    %c0_i32 = arith.constant 0 : i32
    %c0_i32_0 = arith.constant 0 : i32
    return %c0_i32, %arg0 : i32, i32
  }
}

</mosaic_0001>

<llo_original>
// kernel: center_word_predictor.1
$region0: #{center_word_predictor.1}
  #allocation0 [shape = 'u32[]', space=smem, size = 0x4, offset = 0x4, fixed_abs, tag = 'smem constant byte address 0x4 - core index']
  #allocation1 [shape = 'u32[144,128]{1,0:T(1,128)}', space=vmem, size = 0x12000, scoped, tag = 'internal scratch']
  %s0 = inlined_call_operand.vmem [shape: s32[8,8], index: 0, kind: input, shape index: {}]
  %s1 = inlined_call_operand.vmem [shape: f32[128,32], index: 1, kind: input, shape index: {}]
  %s2 = inlined_call_operand.vmem [shape: f32[128,32], index: 2, kind: input, shape index: {}]
  %s3 = inlined_call_operand.vmem [shape: f32[1,128], index: 3, kind: input, shape index: {}]
  %s4 = inlined_call_operand.vmem [shape: f32[8,128], index: 4, kind: output, shape index: {}]
  %s5 = sld [smem:[#allocation0]]
  $region26: #{center_word_predictor.1} parent=0
    _
  %s7 = ssub.s32 1, %s5
  %s8 = scalar_select 0, %s7, %s5
  // Predicated region
  $region2: #{center_word_predictor.1} parent=0 // pred_check
    _
  $region3: #{center_word_predictor.1} parent=0 // pred_check_branch
    %10 = sbr.rel (0) target = $region5
  $region4: #{center_word_predictor.1} parent=0 // pred_region
    _
  $region5: #{center_word_predictor.1} parent=0 // pred_fallthru
    _
  // Predicated region
  $region6: #{center_word_predictor.1} parent=0 // pred_check
    _
  $region7: #{center_word_predictor.1} parent=0 // pred_check_branch
    %12 = sbr.rel (0) target = $region9
  $region8: #{center_word_predictor.1} parent=0 // pred_region
    _
  $region9: #{center_word_predictor.1} parent=0 // pred_fallthru
    _
  // Predicated region
  $region10: #{center_word_predictor.1} parent=0 // pred_check
    _
  $region11: #{center_word_predictor.1} parent=0 // pred_check_branch
    %14 = sbr.rel (0) target = $region13
  $region12: #{center_word_predictor.1} parent=0 // pred_region
    _
  $region13: #{center_word_predictor.1} parent=0 // pred_fallthru
    _
  // Predicated region
  $region14: #{center_word_predictor.1} parent=0 // pred_check
    _
  $region15: #{center_word_predictor.1} parent=0 // pred_check_branch
    %16 = sbr.rel (0) target = $region17
  $region16: #{center_word_predictor.1} parent=0 // pred_region
    _
  $region17: #{center_word_predictor.1} parent=0 // pred_fallthru
    _
  %v18 = vld [vmem:[%s0] sm:$0xff]
  %v19 = vld [vmem:[%s1] sm:$0xff]
  %v20 = vld [vmem:[%s1 + $0x8] sm:$0xff]
  %v21 = vld [vmem:[%s1 + $0x10] sm:$0xff]
  %v22 = vld [vmem:[%s1 + $0x18] sm:$0xff]
  %v23 = vld [vmem:[%s1 + $0x20] sm:$0xff]
  %v24 = vld [vmem:[%s1 + $0x28] sm:$0xff]
  %v25 = vld [vmem:[%s1 + $0x30] sm:$0xff]
  %v26 = vld [vmem:[%s1 + $0x38] sm:$0xff]
  %v27 = vld [vmem:[%s1 + $0x40] sm:$0xff]
  %v28 = vld [vmem:[%s1 + $0x48] sm:$0xff]
  %v29 = vld [vmem:[%s1 + $0x50] sm:$0xff]
  %v30 = vld [vmem:[%s1 + $0x58] sm:$0xff]
  %v31 = vld [vmem:[%s1 + $0x60] sm:$0xff]
  %v32 = vld [vmem:[%s1 + $0x68] sm:$0xff]
  %v33 = vld [vmem:[%s1 + $0x70] sm:$0xff]
  %v34 = vld [vmem:[%s1 + $0x78] sm:$0xff]
  %v35 = vld [vmem:[%s2] sm:$0xff]
  %v36 = vld [vmem:[%s2 + $0x8] sm:$0xff]
  %v37 = vld [vmem:[%s2 + $0x10] sm:$0xff]
  %v38 = vld [vmem:[%s2 + $0x18] sm:$0xff]
  %v39 = vld [vmem:[%s2 + $0x20] sm:$0xff]
  %v40 = vld [vmem:[%s2 + $0x28] sm:$0xff]
  %v41 = vld [vmem:[%s2 + $0x30] sm:$0xff]
  %v42 = vld [vmem:[%s2 + $0x38] sm:$0xff]
  %v43 = vld [vmem:[%s2 + $0x40] sm:$0xff]
  %v44 = vld [vmem:[%s2 + $0x48] sm:$0xff]
  %v45 = vld [vmem:[%s2 + $0x50] sm:$0xff]
  %v46 = vld [vmem:[%s2 + $0x58] sm:$0xff]
  %v47 = vld [vmem:[%s2 + $0x60] sm:$0xff]
  %v48 = vld [vmem:[%s2 + $0x68] sm:$0xff]
  %v49 = vld [vmem:[%s2 + $0x70] sm:$0xff]
  %v50 = vld [vmem:[%s2 + $0x78] sm:$0xff]
  %v51 = vld [vmem:[%s3] sm:$0x1]
  %v52 = vlaneseq
  %v53 = vand.u32 %v52, 127
  %v54 = vlaneseq
  %v55 = vshrl.u32 %v54, 7
  %v56 = vsub.s32 0, %v55
  %v57 = vrot.slane %v18, %v56
  %59 = vbcast.lane.b32.xlu0 %v57, 256
  %v60 = vpop.permute.xlu0 %59
  %v61 = vlaneseq
  %v62 = vshrl.u32 %v61, 7
  %v63 = vsub.s32 1, %v62
  %v64 = vrot.slane %v18, %v63
  %66 = vbcast.lane.b32.xlu0 %v64, 256
  %v67 = vpop.permute.xlu0 %66
  %v68 = vlaneseq
  %v69 = vshrl.u32 %v68, 7
  %v70 = vsub.s32 2, %v69
  %v71 = vrot.slane %v18, %v70
  %73 = vbcast.lane.b32.xlu0 %v71, 256
  %v74 = vpop.permute.xlu0 %73
  %v75 = vlaneseq
  %v76 = vshrl.u32 %v75, 7
  %v77 = vsub.s32 3, %v76
  %v78 = vrot.slane %v18, %v77
  %80 = vbcast.lane.b32.xlu0 %v78, 256
  %v81 = vpop.permute.xlu0 %80
  %v82 = vlaneseq
  %v83 = vshrl.u32 %v82, 7
  %v84 = vsub.s32 4, %v83
  %v85 = vrot.slane %v18, %v84
  %87 = vbcast.lane.b32.xlu0 %v85, 256
  %v88 = vpop.permute.xlu0 %87
  %v89 = vlaneseq
  %v90 = vshrl.u32 %v89, 7
  %v91 = vsub.s32 5, %v90
  %v92 = vrot.slane %v18, %v91
  %94 = vbcast.lane.b32.xlu0 %v92, 256
  %v95 = vpop.permute.xlu0 %94
  %v96 = vlaneseq
  %v97 = vshrl.u32 %v96, 7
  %v98 = vsub.s32 6, %v97
  %v99 = vrot.slane %v18, %v98
  %101 = vbcast.lane.b32.xlu0 %v99, 256
  %v102 = vpop.permute.xlu0 %101
  %v103 = vlaneseq
  %v104 = vshrl.u32 %v103, 7
  %v105 = vsub.s32 7, %v104
  %v106 = vrot.slane %v18, %v105
  %108 = vbcast.lane.b32.xlu0 %v106, 256
  %v109 = vpop.permute.xlu0 %108
  %vm110 = vcmp.eq.s32.totalorder %v60, %v53
  %vm111 = vcmp.eq.s32.totalorder %v67, %v53
  %vm112 = vcmp.eq.s32.totalorder %v74, %v53
  %vm113 = vcmp.eq.s32.totalorder %v81, %v53
  %vm114 = vcmp.eq.s32.totalorder %v88, %v53
  %vm115 = vcmp.eq.s32.totalorder %v95, %v53
  %vm116 = vcmp.eq.s32.totalorder %v102, %v53
  %vm117 = vcmp.eq.s32.totalorder %v109, %v53
  %v118 = vsel %vm110, 1, 0
  %v119 = vsel %vm111, 1, 0
  %v120 = vsel %vm112, 1, 0
  %v121 = vsel %vm113, 1, 0
  %v122 = vsel %vm114, 1, 0
  %v123 = vsel %vm115, 1, 0
  %v124 = vsel %vm116, 1, 0
  %v125 = vsel %vm117, 1, 0
  %v126 = vcvt.s32.f32 %v118
  %v127 = vcvt.s32.f32 %v119
  %v128 = vcvt.s32.f32 %v120
  %v129 = vcvt.s32.f32 %v121
  %v130 = vcvt.s32.f32 %v122
  %v131 = vcvt.s32.f32 %v123
  %v132 = vcvt.s32.f32 %v124
  %v133 = vcvt.s32.f32 %v125
  %v134 = vrot.slane %v126, 4
  %v135 = vadd.f32 %v126, %v134
  %v136 = vrot.slane %v135, 2
  %v137 = vadd.f32 %v135, %v136
  %v138 = vrot.slane %v137, 1
  %v139 = vadd.f32 %v137, %v138
  %v140 = vrot.slane %v127, 4
  %v141 = vadd.f32 %v127, %v140
  %v142 = vrot.slane %v141, 2
  %v143 = vadd.f32 %v141, %v142
  %v144 = vrot.slane %v143, 1
  %v145 = vadd.f32 %v143, %v144
  %v146 = vrot.slane %v128, 4
  %v147 = vadd.f32 %v128, %v146
  %v148 = vrot.slane %v147, 2
  %v149 = vadd.f32 %v147, %v148
  %v150 = vrot.slane %v149, 1
  %v151 = vadd.f32 %v149, %v150
  %v152 = vrot.slane %v129, 4
  %v153 = vadd.f32 %v129, %v152
  %v154 = vrot.slane %v153, 2
  %v155 = vadd.f32 %v153, %v154
  %v156 = vrot.slane %v155, 1
  %v157 = vadd.f32 %v155, %v156
  %v158 = vrot.slane %v130, 4
  %v159 = vadd.f32 %v130, %v158
  %v160 = vrot.slane %v159, 2
  %v161 = vadd.f32 %v159, %v160
  %v162 = vrot.slane %v161, 1
  %v163 = vadd.f32 %v161, %v162
  %v164 = vrot.slane %v131, 4
  %v165 = vadd.f32 %v131, %v164
  %v166 = vrot.slane %v165, 2
  %v167 = vadd.f32 %v165, %v166
  %v168 = vrot.slane %v167, 1
  %v169 = vadd.f32 %v167, %v168
  %v170 = vrot.slane %v132, 4
  %v171 = vadd.f32 %v132, %v170
  %v172 = vrot.slane %v171, 2
  %v173 = vadd.f32 %v171, %v172
  %v174 = vrot.slane %v173, 1
  %v175 = vadd.f32 %v173, %v174
  %v176 = vrot.slane %v133, 4
  %v177 = vadd.f32 %v133, %v176
  %v178 = vrot.slane %v177, 2
  %v179 = vadd.f32 %v177, %v178
  %v180 = vrot.slane %v179, 1
  %v181 = vadd.f32 %v179, %v180
  %v182 = vpack.c.bf16 %v139, %v139
  %v183 = vpack.c.bf16 %v145, %v145
  %v184 = vpack.c.bf16 %v151, %v151
  %v185 = vpack.c.bf16 %v157, %v157
  %v186 = vpack.c.bf16 %v163, %v163
  %v187 = vpack.c.bf16 %v169, %v169
  %v188 = vpack.c.bf16 %v175, %v175
  %v189 = vpack.c.bf16 %v181, %v181
  %v190 = vpack.c.bf16 %v20, %v19
  %v191 = vpack.c.bf16 %v22, %v21
  %v192 = vpack.c.bf16 %v24, %v23
  %v193 = vpack.c.bf16 %v26, %v25
  %v194 = vpack.c.bf16 %v28, %v27
  %v195 = vpack.c.bf16 %v30, %v29
  %v196 = vpack.c.bf16 %v32, %v31
  %v197 = vpack.c.bf16 %v34, %v33
  %v206 = vunpack.c.l.b16 %v182
  %v207 = vunpack.c.l.b16 %v183
  %v208 = vunpack.c.l.b16 %v184
  %v209 = vunpack.c.l.b16 %v185
  %v210 = vunpack.c.l.b16 %v186
  %v211 = vunpack.c.l.b16 %v187
  %v212 = vunpack.c.l.b16 %v188
  %v213 = vunpack.c.l.b16 %v189
  %vm214 = vcmask 1041409
  %v215 = vsel %vm214, %v207, %v206
  %vm216 = vcmask 1042434
  %v217 = vsel %vm216, %v208, %v215
  %vm218 = vcmask 1043459
  %v219 = vsel %vm218, %v209, %v217
  %vm220 = vcmask 1044484
  %v221 = vsel %vm220, %v210, %v219
  %vm222 = vcmask 1045509
  %v223 = vsel %vm222, %v211, %v221
  %vm224 = vcmask 1046534
  %v225 = vsel %vm224, %v212, %v223
  %vm226 = vcmask 1047559
  %v227 = vsel %vm226, %v213, %v225
  %v228 = vpack.c.b16 %v227, %v227
  %230 = vmatprep.subr.bf16.mxu0 0
  %231 = vmatpush1.bf16.msra.mxu0 %v190
  %232 = vmatprep.subr.bf16.mxu0 0
  %233 = vmatpush1.bf16.msra.mxu0 %v191
  %234 = vmatprep.subr.bf16.mxu0 0
  %235 = vmatpush1.bf16.msra.mxu0 %v192
  %236 = vmatprep.subr.bf16.mxu0 0
  %237 = vmatpush1.bf16.msra.mxu0 %v193
  %238 = vmatprep.subr.bf16.mxu0 0
  %239 = vmatpush1.bf16.msra.mxu0 %v194
  %240 = vmatprep.subr.bf16.mxu0 0
  %241 = vmatpush1.bf16.msra.mxu0 %v195
  %242 = vmatprep.subr.bf16.mxu0 0
  %243 = vmatpush1.bf16.msra.mxu0 %v196
  %244 = vmatprep.subr.bf16.mxu0 0
  %245 = vmatpush1.bf16.msra.mxu0 %v197
  %246 = vmatprep.subr.bf16.mxu0 0
  %247 = vmatpush1.bf16.msra.mxu0 0
  %248 = vmatprep.subr.bf16.mxu0 0
  %249 = vmatpush1.bf16.msra.mxu0 0
  %250 = vmatprep.subr.bf16.mxu0 0
  %251 = vmatpush1.bf16.msra.mxu0 0
  %252 = vmatprep.subr.bf16.mxu0 0
  %253 = vmatpush1.bf16.msra.mxu0 0
  %254 = vmatprep.subr.bf16.mxu0 0
  %255 = vmatpush1.bf16.msra.mxu0 0
  %256 = vmatprep.subr.bf16.mxu0 0
  %257 = vmatpush1.bf16.msra.mxu0 0
  %258 = vmatprep.subr.bf16.mxu0 0
  %259 = vmatpush1.bf16.msra.mxu0 0
  %260 = vmatprep.subr.bf16.mxu0 0
  %261 = vmatpush1.bf16.msra.mxu0 0
  %262 = vmatprep.mubr.bf16.mxu0 0
  %263 = vmatmul.mubr.bf16.gmra.mrb[0].mxu0 %v228
  %v264 = vpop.f32.mrb[0].mxu0
  %v265 = vadd.f32 0.0, %v264
  %v266 = vpop.f32.mrb[0].mxu0
  %v267 = vpop.f32.mrb[0].mxu0
  %v268 = vpop.f32.mrb[0].mxu0
  %269 = vdwg.mxu0
  %v270 = vmul.f32 %v265, 0.125
  %v271 = vpack.c.bf16 %v270, %v270
  %v272 = vpack.c.bf16 %v36, %v35
  %v273 = vpack.c.bf16 %v38, %v37
  %v274 = vpack.c.bf16 %v40, %v39
  %v275 = vpack.c.bf16 %v42, %v41
  %v276 = vpack.c.bf16 %v44, %v43
  %v277 = vpack.c.bf16 %v46, %v45
  %v278 = vpack.c.bf16 %v48, %v47
  %v279 = vpack.c.bf16 %v50, %v49
  %v281 = vlaneseq
  %v282 = vshrl.u32 %v281, 7
  %v283 = vsub.s32 0, %v282
  %v284 = vrot.slane %v51, %v283
  %vm286 = vcmask 261120
  %v288 = vsel %vm286, %v271, 0
  %v291 = vsel %vm286, %v272, 0
  %v294 = vsel %vm286, %v273, 0
  %v297 = vsel %vm286, %v274, 0
  %v300 = vsel %vm286, %v275, 0
  %v303 = vsel %vm286, %v276, 0
  %v306 = vsel %vm286, %v277, 0
  %v309 = vsel %vm286, %v278, 0
  %v312 = vsel %vm286, %v279, 0
  %314 = vmatprep.subr.bf16.mxu0 0
  %315 = vmatpush1.bf16.xpose.msra.mxu0 %v291
  %316 = vmatprep.subr.bf16.mxu0 0
  %317 = vmatpush1.bf16.xpose.msra.mxu0 %v294
  %318 = vmatprep.subr.bf16.mxu0 0
  %319 = vmatpush1.bf16.xpose.msra.mxu0 %v297
  %320 = vmatprep.subr.bf16.mxu0 0
  %321 = vmatpush1.bf16.xpose.msra.mxu0 %v300
  %322 = vmatprep.subr.bf16.mxu0 0
  %323 = vmatpush1.bf16.xpose.msra.mxu0 %v303
  %324 = vmatprep.subr.bf16.mxu0 0
  %325 = vmatpush1.bf16.xpose.msra.mxu0 %v306
  %326 = vmatprep.subr.bf16.mxu0 0
  %327 = vmatpush1.bf16.xpose.msra.mxu0 %v309
  %328 = vmatprep.subr.bf16.mxu0 0
  %329 = vmatpush1.bf16.xpose.msra.mxu0 %v312
  %330 = vmatprep.subr.bf16.mxu0 0
  %331 = vmatpush1.bf16.xpose.msra.mxu0 0
  %332 = vmatprep.subr.bf16.mxu0 0
  %333 = vmatpush1.bf16.xpose.msra.mxu0 0
  %334 = vmatprep.subr.bf16.mxu0 0
  %335 = vmatpush1.bf16.xpose.msra.mxu0 0
  %336 = vmatprep.subr.bf16.mxu0 0
  %337 = vmatpush1.bf16.xpose.msra.mxu0 0
  %338 = vmatprep.subr.bf16.mxu0 0
  %339 = vmatpush1.bf16.xpose.msra.mxu0 0
  %340 = vmatprep.subr.bf16.mxu0 0
  %341 = vmatpush1.bf16.xpose.msra.mxu0 0
  %342 = vmatprep.subr.bf16.mxu0 0
  %343 = vmatpush1.bf16.xpose.msra.mxu0 0
  %344 = vmatprep.subr.bf16.mxu0 0
  %345 = vmatpush1.bf16.xpose.msra.mxu0 0
  %346 = vmatprep.mubr.bf16.mxu0 0
  %347 = vmatmul.mubr.bf16.gmra.mrb[0].mxu0 %v288
  %v348 = vpop.f32.mrb[0].mxu0
  %v349 = vadd.f32 %v284, %v348
  %v350 = vpop.f32.mrb[0].mxu0
  %v351 = vpop.f32.mrb[0].mxu0
  %v352 = vpop.f32.mrb[0].mxu0
  %353 = vdwg.mxu0
  %354 = vst [vmem:[%s4] sm:$0xff] %v349
  // Predicated region
  $region18: #{center_word_predictor.1} parent=0 // pred_check
    _
  $region19: #{center_word_predictor.1} parent=0 // pred_check_branch
    %356 = sbr.rel (0) target = $region21
  $region20: #{center_word_predictor.1} parent=0 // pred_region
    _
  $region21: #{center_word_predictor.1} parent=0 // pred_fallthru
    _
  // Predicated region
  $region22: #{center_word_predictor.1} parent=0 // pred_check
    _
  $region23: #{center_word_predictor.1} parent=0 // pred_check_branch
    %358 = sbr.rel (0) target = $region25
  $region24: #{center_word_predictor.1} parent=0 // pred_region
    _
  $region25: #{center_word_predictor.1} parent=0 // pred_fallthru
    _

</llo_original>
